<compile_context>
chip_gen: v7x
topology: tpu7x:2x2x1
jax: 0.10.0
libtpu: 0.0.40
codegen_flags: <defaults>
</compile_context>

<pallas_src>
import functools

import jax
import jax.numpy as jnp
from jax import lax
from jax.experimental import pallas as pl
from jax.experimental.pallas import tpu as pltpu


def _round_up(n, m):
    return ((n + m - 1) // m) * m


def _padded_vmem_bytes(shape, dtype):
    """(sublane, 128)-tile-padding-aware VMEM footprint of one buffer."""
    itemsize = jnp.dtype(dtype).itemsize
    sublane = 8 * max(4 // itemsize, 1)          # f32 -> 8, bf16 -> 16
    if len(shape) < 2:
        return _round_up(int(shape[0]) if shape else 1, 128) * itemsize
    lead = 1
    for d in shape[:-2]:
        lead *= int(d)
    rows = _round_up(int(shape[-2]), sublane)
    cols = _round_up(int(shape[-1]), 128)
    return lead * rows * cols * itemsize


def _lstm_fc_kernel(
    gates_ref,    # (Tt, Bt, 4H) streamed pre-activations x@W_ih^T + b, gates [i|f|g|o]
    whh_ref,      # (H, 4H)      fused recurrent weights (lane-dense columns)
    wfc_ref,      # (H, K)
    bfc_ref,      # (1, K)
    out_ref,      # (Bt, K)
    h_ref, c_ref,                 # (Bt, H) f32 carried state (VMEM scratch)
    *, H, Tt, Bt, T_real, mask_tail, unroll,
):
    t_pid = pl.program_id(1)

    @pl.when(t_pid == 0)
    def _init():
        h_ref[...] = jnp.zeros_like(h_ref)
        c_ref[...] = jnp.zeros_like(c_ref)

    # ---- loop-invariant values hoisted off the serial recurrence -----------
    whh = whh_ref[...]                         # (H, 4H), f32 or bf16
    mxu_dtype = whh.dtype
    lane = lax.broadcasted_iota(jnp.int32, (Bt, 4 * H), 1)
    is_g = (lane >= 2 * H) & (lane < 3 * H)    # gate order [i, f, g, o]
    # sigmoid(x) = 0.5*tanh(0.5*x) + 0.5 ;  tanh(x) = 1.0*tanh(1.0*x) + 0.0
    alpha = jnp.where(is_g, 1.0, 0.5).astype(jnp.float32)
    beta = jnp.where(is_g, 0.0, 0.5).astype(jnp.float32)

    base_t = t_pid * Tt

    # ---- recurrence over the Tt timesteps of this block ---------------------
    def step(t, carry):
        h, c = carry
        # ONE lane-dense MXU op on the serial chain: (Bt,H) x (H,4H).
        pre = gates_ref[t].astype(jnp.float32) + jnp.dot(
            h.astype(mxu_dtype), whh, preferred_element_type=jnp.float32)
        # ONE full-width EUP pass activates all four gates.
        th = jnp.tanh(pre * alpha)
        act = th * alpha + beta
        i_g = act[:, 0 * H:1 * H]
        f_g = act[:, 1 * H:2 * H]
        g_g = act[:, 2 * H:3 * H]
        o_g = act[:, 3 * H:4 * H]
        c_new = f_g * c + i_g * g_g
        h_new = o_g * jnp.tanh(c_new)          # second (and last) EUP pass
        if mask_tail:
            valid = (base_t + t) < T_real
            h_new = jnp.where(valid, h_new, h)
            c_new = jnp.where(valid, c_new, c)
        return h_new, c_new

    h_T, c_T = lax.fori_loop(0, Tt, step, (h_ref[...], c_ref[...]), unroll=unroll)
    h_ref[...] = h_T
    c_ref[...] = c_T

    # ---- FC + sigmoid on the final hidden state ------------------------------
    @pl.when(t_pid == pl.num_programs(1) - 1)
    def _final():
        logits = jnp.dot(h_T, wfc_ref[...], preferred_element_type=jnp.float32) + bfc_ref[...]
        out_ref[...] = jax.nn.sigmoid(logits).astype(out_ref.dtype)


def fault_detector_forward(x, params, *, time_block=128, batch_block=64,
                           use_bf16=False):
    """x: (B, T, n_signals) float32 -> (B, tagset_size) float32."""
    w_ih, w_hh, b_ih, b_hh, w_fc, b_fc = (
        params["w_ih"], params["w_hh"], params["b_ih"],
        params["b_hh"], params["w_fc"], params["b_fc"],
    )
    B, T, _ = x.shape
    H = w_hh.shape[1]            # w_hh is (4H, H) in PyTorch layout
    K = w_fc.shape[0]            # w_fc is (K, H) in PyTorch layout
    G = 4 * H

    stream_dtype = jnp.bfloat16 if use_bf16 else jnp.float32

    # ---- tiling --------------------------------------------------------------
    Bp = _round_up(B, 8)                                   # f32 sublane pad
    Bt = min(Bp, _round_up(max(batch_block, 1), 8))
    while Bp % Bt:
        Bt -= 8
    nb = Bp // Bt

    Tt = max(1, min(time_block, T))
    stream_budget = 16 * 1024 * 1024                       # conservative for v7x
    while Tt > 8 and 2 * _padded_vmem_bytes((Tt, Bt, G), stream_dtype) > stream_budget:
        Tt = max(8, (Tt + 1) // 2)
    nt = -(-T // Tt)
    Tp = nt * Tt

    # ---- input projection hoisted to ONE XLA GEMM (time-major pre-acts) -----
    wih_t = jnp.transpose(w_ih).astype(jnp.float32)                    # (D, 4H)
    bias = (b_ih + b_hh).astype(jnp.float32)                           # (4H,)
    gates_pre = jnp.einsum("btd,dg->tbg", x.astype(jnp.float32), wih_t) + bias
    gates_pre = jnp.pad(gates_pre, ((0, Tp - T), (0, Bp - B), (0, 0)))
    gates_pre = gates_pre.astype(stream_dtype)                         # (Tp, Bp, 4H)

    whh_f = jnp.transpose(w_hh).astype(stream_dtype)                   # (H, 4H) fused
    wfc_t = jnp.transpose(w_fc).astype(jnp.float32)                    # (H, K)
    bfc = b_fc.reshape(1, K).astype(jnp.float32)                       # (1, K)

    unroll = Tt if Tt <= 32 else 16
    kernel = functools.partial(
        _lstm_fc_kernel, H=H, Tt=Tt, Bt=Bt, T_real=T,
        mask_tail=(Tp != T), unroll=unroll,
    )

    # ---- tile-padding-aware VMEM budget --------------------------------------
    vmem_bytes = (
        2 * _padded_vmem_bytes((Tt, Bt, G), stream_dtype)   # double-buffered stream
        + 2 * _padded_vmem_bytes((H, G), stream_dtype)      # W_hh (2 buffers)
        + 2 * _padded_vmem_bytes((H, K), jnp.float32)       # W_fc
        + 2 * _padded_vmem_bytes((1, K), jnp.float32)       # b_fc
        + 2 * _padded_vmem_bytes((Bt, K), jnp.float32)      # out
        + 2 * _padded_vmem_bytes((Bt, H), jnp.float32)      # h, c scratch
    )
    vmem_limit = int(min(max(vmem_bytes + (4 << 20), 16 << 20), 48 << 20))

    itemsize = jnp.dtype(stream_dtype).itemsize
    flops = 2 * Tp * Bp * H * G + 2 * Bp * H * K
    transcendentals = Tp * Bp * 5 * H
    bytes_accessed = (Tp * Bp * G + H * G) * itemsize + 4 * (H * K + K + Bp * K)

    grid_spec = pltpu.PrefetchScalarGridSpec(
        num_scalar_prefetch=0,
        grid=(nb, nt),
        in_specs=[
            pl.BlockSpec((Tt, Bt, G), lambda b, t: (t, b, 0)),  # streamed pre-acts
            pl.BlockSpec((H, G), lambda b, t: (0, 0)),          # fused W_hh (resident)
            pl.BlockSpec((H, K), lambda b, t: (0, 0)),          # fc W
            pl.BlockSpec((1, K), lambda b, t: (0, 0)),          # fc b
        ],
        out_specs=pl.BlockSpec((Bt, K), lambda b, t: (b, 0)),
        scratch_shapes=[
            pltpu.VMEM((Bt, H), jnp.float32),   # h
            pltpu.VMEM((Bt, H), jnp.float32),   # c
        ],
    )

    out = pl.pallas_call(
        kernel,
        out_shape=jax.ShapeDtypeStruct((Bp, K), jnp.float32),
        grid_spec=grid_spec,
        compiler_params=pltpu.CompilerParams(
            dimension_semantics=("parallel", "arbitrary"),   # batch x time
            vmem_limit_bytes=vmem_limit,
        ),
        cost_estimate=pl.CostEstimate(
            flops=int(flops),
            transcendentals=int(transcendentals),
            bytes_accessed=int(bytes_accessed),
        ),
    )(gates_pre, whh_f, wfc_t, bfc)

    return out[:B]


def init_params(key, n_signals, hidden_dim, tagset_size):
    """Deterministic init mirroring PyTorch's U(-1/sqrt(H), 1/sqrt(H))."""
    k = 1.0 / jnp.sqrt(jnp.float32(hidden_dim))
    keys = jax.random.split(key, 6)
    u = lambda kk, shape: jax.random.uniform(kk, shape, jnp.float32, -k, k)
    return {
        "w_ih": u(keys[0], (4 * hidden_dim, n_signals)),
        "w_hh": u(keys[1], (4 * hidden_dim, hidden_dim)),
        "b_ih": u(keys[2], (4 * hidden_dim,)),
        "b_hh": u(keys[3], (4 * hidden_dim,)),
        "w_fc": u(keys[4], (tagset_size, hidden_dim)),
        "b_fc": u(keys[5], (tagset_size,)),
    }


def _reference_forward(x, params):
    """Pure-JAX reference (PyTorch LSTM semantics, batch_first, last step)."""
    w_ih, w_hh = params["w_ih"], params["w_hh"]
    b = params["b_ih"] + params["b_hh"]
    H = w_hh.shape[1]
    B, T, _ = x.shape
    h = jnp.zeros((B, H), jnp.float32)
    c = jnp.zeros((B, H), jnp.float32)
    for t in range(T):
        gates = x[:, t, :] @ w_ih.T + h @ w_hh.T + b
        i = jax.nn.sigmoid(gates[:, 0 * H:1 * H])
        f = jax.nn.sigmoid(gates[:, 1 * H:2 * H])
        g = jnp.tanh(gates[:, 2 * H:3 * H])
        o = jax.nn.sigmoid(gates[:, 3 * H:4 * H])
        c = f * c + i * g
        h = o * jnp.tanh(c)
    logits = h @ params["w_fc"].T + params["b_fc"]
    return jax.nn.sigmoid(logits)


if __name__ == "__main__":
    B, T, n_signals, hidden_dim, tagset_size = 2, 8, 4, 32, 3

    key = jax.random.PRNGKey(0)
    key_x, key_p, key_x2, key_x3 = jax.random.split(key, 4)
    x = jax.random.normal(key_x, (B, T, n_signals), jnp.float32)
    params = init_params(key_p, n_signals, hidden_dim, tagset_size)

    # 1) Single time block, single batch tile.
    out = jax.block_until_ready(fault_detector_forward(x, params))
    ref = _reference_forward(x, params)
    assert out.shape == (B, tagset_size)
    assert jnp.allclose(out, ref, atol=1e-4, rtol=1e-4)

    # 2) T not divisible by the time block -> multi-block streaming + tail mask.
    T2 = 11
    x2 = jax.random.normal(key_x2, (B, T2, n_signals), jnp.float32)
    out2 = jax.block_until_ready(fault_detector_forward(x2, params, time_block=4))
    ref2 = _reference_forward(x2, params)
    assert out2.shape == (B, tagset_size)
    assert jnp.allclose(out2, ref2, atol=1e-4, rtol=1e-4)

    # 3) Multiple batch tiles -> exercises the "parallel" batch grid axis.
    B3 = 10
    x3 = jax.random.normal(key_x3, (B3, T, n_signals), jnp.float32)
    out3 = jax.block_until_ready(
        fault_detector_forward(x3, params, batch_block=8))
    ref3 = _reference_forward(x3, params)
    assert out3.shape == (B3, tagset_size)
    assert jnp.allclose(out3, ref3, atol=1e-4, rtol=1e-4)

    # 4) bf16 MXU operands (f32 accumulation) -> relaxed tolerance vs f32 ref.
    out4 = jax.block_until_ready(
        fault_detector_forward(x, params, use_bf16=True))
    assert out4.shape == (B, tagset_size)
    assert jnp.allclose(out4, ref, atol=3e-2)

    print("KERNEL_OK")
</pallas_src>

<mosaic_0001>
module attributes {stable_mosaic.version = 11 : i64} {
  func.func @_lstm_fc_kernel(%arg0: i32, %arg1: i32, %arg2: memref<8x8x128xf32, #tpu.memory_space<vmem>>, %arg3: memref<32x128xf32, #tpu.memory_space<vmem>>, %arg4: memref<32x3xf32, #tpu.memory_space<vmem>>, %arg5: memref<1x3xf32, #tpu.memory_space<vmem>>, %arg6: memref<8x3xf32, #tpu.memory_space<vmem>>, %arg7: memref<8x32xf32, #tpu.memory_space<vmem>>, %arg8: memref<8x32xf32, #tpu.memory_space<vmem>>) attributes {dimension_semantics = [#tpu.dimension_semantics<parallel>, #tpu.dimension_semantics<arbitrary>], iteration_bounds = array<i64: 1, 1>, scalar_prefetch = 0 : i64, scratch_operands = 2 : i64, tpu.core_type = #tpu.core_type<tc>, window_params = [{transform_indices = @transform_0, window_bounds = array<i64: 8, 8, 128>}, {pipeline_mode = #tpu.pipeline_mode<synchronous>, transform_indices = @transform_1, window_bounds = array<i64: 32, 128>}, {pipeline_mode = #tpu.pipeline_mode<synchronous>, transform_indices = @transform_2, window_bounds = array<i64: 32, 3>}, {pipeline_mode = #tpu.pipeline_mode<synchronous>, transform_indices = @transform_3, window_bounds = array<i64: 1, 3>}, {transform_indices = @transform_4, window_bounds = array<i64: 8, 3>}]} {
    %c0_i32 = arith.constant 0 : i32
    %0 = arith.cmpi eq, %arg1, %c0_i32 : i32
    %1 = arith.extui %0 : i1 to i32
    %c0_i32_0 = arith.constant 0 : i32
    %2 = arith.cmpi ne, %1, %c0_i32_0 : i32
    scf.if %2 {
      %cst_40 = arith.constant 0.000000e+00 : f32
      %167 = vector.broadcast %cst_40 : f32 to vector<8x32xf32>
      %c0_41 = arith.constant 0 : index
      %c0_42 = arith.constant 0 : index
      %168 = vector.load %arg7[%c0_41, %c0_42] : memref<8x32xf32, #tpu.memory_space<vmem>>, vector<8x32xf32>
      tpu.vector_store %arg7[%c0_41, %c0_42], %167 {strides = array<i32>} : memref<8x32xf32, #tpu.memory_space<vmem>>, vector<8x32xf32>,
      %cst_43 = arith.constant 0.000000e+00 : f32
      %169 = vector.broadcast %cst_43 : f32 to vector<8x32xf32>
      %c0_44 = arith.constant 0 : index
      %c0_45 = arith.constant 0 : index
      %170 = vector.load %arg8[%c0_44, %c0_45] : memref<8x32xf32, #tpu.memory_space<vmem>>, vector<8x32xf32>
      tpu.vector_store %arg8[%c0_44, %c0_45], %169 {strides = array<i32>} : memref<8x32xf32, #tpu.memory_space<vmem>>, vector<8x32xf32>,
    } else {
    }
    %c0 = arith.constant 0 : index
    %c0_1 = arith.constant 0 : index
    %3 = vector.load %arg3[%c0, %c0_1] : memref<32x128xf32, #tpu.memory_space<vmem>>, vector<32x128xf32>
    %4 = tpu.iota {dimensions = array<i32: 1>} : vector<8x128xi32>
    %c64_i32 = arith.constant 64 : i32
    %5 = vector.broadcast %c64_i32 : i32 to vector<8x128xi32>
    %6 = arith.cmpi sge, %4, %5 : vector<8x128xi32>
    %c96_i32 = arith.constant 96 : i32
    %7 = vector.broadcast %c96_i32 : i32 to vector<8x128xi32>
    %8 = arith.cmpi slt, %4, %7 : vector<8x128xi32>
    %9 = arith.andi %6, %8 : vector<8x128xi1>
    %cst = arith.constant 1.000000e+00 : f32
    %cst_2 = arith.constant 5.000000e-01 : f32
    %10 = vector.broadcast %cst : f32 to vector<8x128xf32>
    %11 = vector.broadcast %cst_2 : f32 to vector<8x128xf32>
    %12 = arith.select %9, %10, %11 : vector<8x128xi1>, vector<8x128xf32>
    %cst_3 = arith.constant 0.000000e+00 : f32
    %cst_4 = arith.constant 5.000000e-01 : f32
    %13 = vector.broadcast %cst_3 : f32 to vector<8x128xf32>
    %14 = vector.broadcast %cst_4 : f32 to vector<8x128xf32>
    %15 = arith.select %9, %13, %14 : vector<8x128xi1>, vector<8x128xf32>
    %c0_5 = arith.constant 0 : index
    %c0_6 = arith.constant 0 : index
    %16 = vector.load %arg7[%c0_5, %c0_6] : memref<8x32xf32, #tpu.memory_space<vmem>>, vector<8x32xf32>
    %c0_7 = arith.constant 0 : index
    %c0_8 = arith.constant 0 : index
    %17 = vector.load %arg8[%c0_7, %c0_8] : memref<8x32xf32, #tpu.memory_space<vmem>>, vector<8x32xf32>
    %c0_i32_9 = arith.constant 0 : i32
    %18 = arith.index_cast %c0_i32_9 : i32 to index
    %c0_10 = arith.constant 0 : index
    %c0_11 = arith.constant 0 : index
    %19 = vector.load %arg2[%18, %c0_10, %c0_11] : memref<8x8x128xf32, #tpu.memory_space<vmem>>, vector<1x8x128xf32>
    %20 = vector.shape_cast %19 : vector<1x8x128xf32> to vector<8x128xf32>
    %cst_12 = arith.constant dense<0.000000e+00> : vector<8x128xf32>
    %21 = tpu.matmul %16, %3, %cst_12 {dimension_numbers = #tpu.dot_dimension_numbers<[1], [0], [0], [1], [0, 0, 1, 1], [], []>} : vector<8x32xf32>, vector<32x128xf32>, vector<8x128xf32> -> vector<8x128xf32>
    %22 = arith.addf %20, %21 : vector<8x128xf32>
    %23 = arith.mulf %22, %12 : vector<8x128xf32>
    %24 = math.tanh %23 : vector<8x128xf32>
    %25 = arith.mulf %24, %12 : vector<8x128xf32>
    %26 = arith.addf %25, %15 : vector<8x128xf32>
    %27 = vector.extract_strided_slice %26 {offsets = [0, 0], sizes = [8, 32], strides = [1, 1]} : vector<8x128xf32> to vector<8x32xf32>
    %28 = vector.extract_strided_slice %26 {offsets = [0, 32], sizes = [8, 32], strides = [1, 1]} : vector<8x128xf32> to vector<8x32xf32>
    %29 = vector.extract_strided_slice %26 {offsets = [0, 64], sizes = [8, 32], strides = [1, 1]} : vector<8x128xf32> to vector<8x32xf32>
    %30 = vector.extract_strided_slice %26 {offsets = [0, 96], sizes = [8, 32], strides = [1, 1]} : vector<8x128xf32> to vector<8x32xf32>
    %31 = arith.mulf %28, %17 : vector<8x32xf32>
    %32 = arith.mulf %27, %29 : vector<8x32xf32>
    %33 = arith.addf %31, %32 : vector<8x32xf32>
    %34 = math.tanh %33 : vector<8x32xf32>
    %35 = arith.mulf %30, %34 : vector<8x32xf32>
    %c1_i32 = arith.constant 1 : i32
    %36 = arith.index_cast %c1_i32 : i32 to index
    %c0_13 = arith.constant 0 : index
    %c0_14 = arith.constant 0 : index
    %37 = vector.load %arg2[%36, %c0_13, %c0_14] : memref<8x8x128xf32, #tpu.memory_space<vmem>>, vector<1x8x128xf32>
    %38 = vector.shape_cast %37 : vector<1x8x128xf32> to vector<8x128xf32>
    %cst_15 = arith.constant dense<0.000000e+00> : vector<8x128xf32>
    %39 = tpu.matmul %35, %3, %cst_15 {dimension_numbers = #tpu.dot_dimension_numbers<[1], [0], [0], [1], [0, 0, 1, 1], [], []>} : vector<8x32xf32>, vector<32x128xf32>, vector<8x128xf32> -> vector<8x128xf32>
    %40 = arith.addf %38, %39 : vector<8x128xf32>
    %41 = arith.mulf %40, %12 : vector<8x128xf32>
    %42 = math.tanh %41 : vector<8x128xf32>
    %43 = arith.mulf %42, %12 : vector<8x128xf32>
    %44 = arith.addf %43, %15 : vector<8x128xf32>
    %45 = vector.extract_strided_slice %44 {offsets = [0, 0], sizes = [8, 32], strides = [1, 1]} : vector<8x128xf32> to vector<8x32xf32>
    %46 = vector.extract_strided_slice %44 {offsets = [0, 32], sizes = [8, 32], strides = [1, 1]} : vector<8x128xf32> to vector<8x32xf32>
    %47 = vector.extract_strided_slice %44 {offsets = [0, 64], sizes = [8, 32], strides = [1, 1]} : vector<8x128xf32> to vector<8x32xf32>
    %48 = vector.extract_strided_slice %44 {offsets = [0, 96], sizes = [8, 32], strides = [1, 1]} : vector<8x128xf32> to vector<8x32xf32>
    %49 = arith.mulf %46, %33 : vector<8x32xf32>
    %50 = arith.mulf %45, %47 : vector<8x32xf32>
    %51 = arith.addf %49, %50 : vector<8x32xf32>
    %52 = math.tanh %51 : vector<8x32xf32>
    %53 = arith.mulf %48, %52 : vector<8x32xf32>
    %c2_i32 = arith.constant 2 : i32
    %54 = arith.index_cast %c2_i32 : i32 to index
    %c0_16 = arith.constant 0 : index
    %c0_17 = arith.constant 0 : index
    %55 = vector.load %arg2[%54, %c0_16, %c0_17] : memref<8x8x128xf32, #tpu.memory_space<vmem>>, vector<1x8x128xf32>
    %56 = vector.shape_cast %55 : vector<1x8x128xf32> to vector<8x128xf32>
    %cst_18 = arith.constant dense<0.000000e+00> : vector<8x128xf32>
    %57 = tpu.matmul %53, %3, %cst_18 {dimension_numbers = #tpu.dot_dimension_numbers<[1], [0], [0], [1], [0, 0, 1, 1], [], []>} : vector<8x32xf32>, vector<32x128xf32>, vector<8x128xf32> -> vector<8x128xf32>
    %58 = arith.addf %56, %57 : vector<8x128xf32>
    %59 = arith.mulf %58, %12 : vector<8x128xf32>
    %60 = math.tanh %59 : vector<8x128xf32>
    %61 = arith.mulf %60, %12 : vector<8x128xf32>
    %62 = arith.addf %61, %15 : vector<8x128xf32>
    %63 = vector.extract_strided_slice %62 {offsets = [0, 0], sizes = [8, 32], strides = [1, 1]} : vector<8x128xf32> to vector<8x32xf32>
    %64 = vector.extract_strided_slice %62 {offsets = [0, 32], sizes = [8, 32], strides = [1, 1]} : vector<8x128xf32> to vector<8x32xf32>
    %65 = vector.extract_strided_slice %62 {offsets = [0, 64], sizes = [8, 32], strides = [1, 1]} : vector<8x128xf32> to vector<8x32xf32>
    %66 = vector.extract_strided_slice %62 {offsets = [0, 96], sizes = [8, 32], strides = [1, 1]} : vector<8x128xf32> to vector<8x32xf32>
    %67 = arith.mulf %64, %51 : vector<8x32xf32>
    %68 = arith.mulf %63, %65 : vector<8x32xf32>
    %69 = arith.addf %67, %68 : vector<8x32xf32>
    %70 = math.tanh %69 : vector<8x32xf32>
    %71 = arith.mulf %66, %70 : vector<8x32xf32>
    %c3_i32 = arith.constant 3 : i32
    %72 = arith.index_cast %c3_i32 : i32 to index
    %c0_19 = arith.constant 0 : index
    %c0_20 = arith.constant 0 : index
    %73 = vector.load %arg2[%72, %c0_19, %c0_20] : memref<8x8x128xf32, #tpu.memory_space<vmem>>, vector<1x8x128xf32>
    %74 = vector.shape_cast %73 : vector<1x8x128xf32> to vector<8x128xf32>
    %cst_21 = arith.constant dense<0.000000e+00> : vector<8x128xf32>
    %75 = tpu.matmul %71, %3, %cst_21 {dimension_numbers = #tpu.dot_dimension_numbers<[1], [0], [0], [1], [0, 0, 1, 1], [], []>} : vector<8x32xf32>, vector<32x128xf32>, vector<8x128xf32> -> vector<8x128xf32>
    %76 = arith.addf %74, %75 : vector<8x128xf32>
    %77 = arith.mulf %76, %12 : vector<8x128xf32>
    %78 = math.tanh %77 : vector<8x128xf32>
    %79 = arith.mulf %78, %12 : vector<8x128xf32>
    %80 = arith.addf %79, %15 : vector<8x128xf32>
    %81 = vector.extract_strided_slice %80 {offsets = [0, 0], sizes = [8, 32], strides = [1, 1]} : vector<8x128xf32> to vector<8x32xf32>
    %82 = vector.extract_strided_slice %80 {offsets = [0, 32], sizes = [8, 32], strides = [1, 1]} : vector<8x128xf32> to vector<8x32xf32>
    %83 = vector.extract_strided_slice %80 {offsets = [0, 64], sizes = [8, 32], strides = [1, 1]} : vector<8x128xf32> to vector<8x32xf32>
    %84 = vector.extract_strided_slice %80 {offsets = [0, 96], sizes = [8, 32], strides = [1, 1]} : vector<8x128xf32> to vector<8x32xf32>
    %85 = arith.mulf %82, %69 : vector<8x32xf32>
    %86 = arith.mulf %81, %83 : vector<8x32xf32>
    %87 = arith.addf %85, %86 : vector<8x32xf32>
    %88 = math.tanh %87 : vector<8x32xf32>
    %89 = arith.mulf %84, %88 : vector<8x32xf32>
    %c4_i32 = arith.constant 4 : i32
    %90 = arith.index_cast %c4_i32 : i32 to index
    %c0_22 = arith.constant 0 : index
    %c0_23 = arith.constant 0 : index
    %91 = vector.load %arg2[%90, %c0_22, %c0_23] : memref<8x8x128xf32, #tpu.memory_space<vmem>>, vector<1x8x128xf32>
    %92 = vector.shape_cast %91 : vector<1x8x128xf32> to vector<8x128xf32>
    %cst_24 = arith.constant dense<0.000000e+00> : vector<8x128xf32>
    %93 = tpu.matmul %89, %3, %cst_24 {dimension_numbers = #tpu.dot_dimension_numbers<[1], [0], [0], [1], [0, 0, 1, 1], [], []>} : vector<8x32xf32>, vector<32x128xf32>, vector<8x128xf32> -> vector<8x128xf32>
    %94 = arith.addf %92, %93 : vector<8x128xf32>
    %95 = arith.mulf %94, %12 : vector<8x128xf32>
    %96 = math.tanh %95 : vector<8x128xf32>
    %97 = arith.mulf %96, %12 : vector<8x128xf32>
    %98 = arith.addf %97, %15 : vector<8x128xf32>
    %99 = vector.extract_strided_slice %98 {offsets = [0, 0], sizes = [8, 32], strides = [1, 1]} : vector<8x128xf32> to vector<8x32xf32>
    %100 = vector.extract_strided_slice %98 {offsets = [0, 32], sizes = [8, 32], strides = [1, 1]} : vector<8x128xf32> to vector<8x32xf32>
    %101 = vector.extract_strided_slice %98 {offsets = [0, 64], sizes = [8, 32], strides = [1, 1]} : vector<8x128xf32> to vector<8x32xf32>
    %102 = vector.extract_strided_slice %98 {offsets = [0, 96], sizes = [8, 32], strides = [1, 1]} : vector<8x128xf32> to vector<8x32xf32>
    %103 = arith.mulf %100, %87 : vector<8x32xf32>
    %104 = arith.mulf %99, %101 : vector<8x32xf32>
    %105 = arith.addf %103, %104 : vector<8x32xf32>
    %106 = math.tanh %105 : vector<8x32xf32>
    %107 = arith.mulf %102, %106 : vector<8x32xf32>
    %c5_i32 = arith.constant 5 : i32
    %108 = arith.index_cast %c5_i32 : i32 to index
    %c0_25 = arith.constant 0 : index
    %c0_26 = arith.constant 0 : index
    %109 = vector.load %arg2[%108, %c0_25, %c0_26] : memref<8x8x128xf32, #tpu.memory_space<vmem>>, vector<1x8x128xf32>
    %110 = vector.shape_cast %109 : vector<1x8x128xf32> to vector<8x128xf32>
    %cst_27 = arith.constant dense<0.000000e+00> : vector<8x128xf32>
    %111 = tpu.matmul %107, %3, %cst_27 {dimension_numbers = #tpu.dot_dimension_numbers<[1], [0], [0], [1], [0, 0, 1, 1], [], []>} : vector<8x32xf32>, vector<32x128xf32>, vector<8x128xf32> -> vector<8x128xf32>
    %112 = arith.addf %110, %111 : vector<8x128xf32>
    %113 = arith.mulf %112, %12 : vector<8x128xf32>
    %114 = math.tanh %113 : vector<8x128xf32>
    %115 = arith.mulf %114, %12 : vector<8x128xf32>
    %116 = arith.addf %115, %15 : vector<8x128xf32>
    %117 = vector.extract_strided_slice %116 {offsets = [0, 0], sizes = [8, 32], strides = [1, 1]} : vector<8x128xf32> to vector<8x32xf32>
    %118 = vector.extract_strided_slice %116 {offsets = [0, 32], sizes = [8, 32], strides = [1, 1]} : vector<8x128xf32> to vector<8x32xf32>
    %119 = vector.extract_strided_slice %116 {offsets = [0, 64], sizes = [8, 32], strides = [1, 1]} : vector<8x128xf32> to vector<8x32xf32>
    %120 = vector.extract_strided_slice %116 {offsets = [0, 96], sizes = [8, 32], strides = [1, 1]} : vector<8x128xf32> to vector<8x32xf32>
    %121 = arith.mulf %118, %105 : vector<8x32xf32>
    %122 = arith.mulf %117, %119 : vector<8x32xf32>
    %123 = arith.addf %121, %122 : vector<8x32xf32>
    %124 = math.tanh %123 : vector<8x32xf32>
    %125 = arith.mulf %120, %124 : vector<8x32xf32>
    %c6_i32 = arith.constant 6 : i32
    %126 = arith.index_cast %c6_i32 : i32 to index
    %c0_28 = arith.constant 0 : index
    %c0_29 = arith.constant 0 : index
    %127 = vector.load %arg2[%126, %c0_28, %c0_29] : memref<8x8x128xf32, #tpu.memory_space<vmem>>, vector<1x8x128xf32>
    %128 = vector.shape_cast %127 : vector<1x8x128xf32> to vector<8x128xf32>
    %cst_30 = arith.constant dense<0.000000e+00> : vector<8x128xf32>
    %129 = tpu.matmul %125, %3, %cst_30 {dimension_numbers = #tpu.dot_dimension_numbers<[1], [0], [0], [1], [0, 0, 1, 1], [], []>} : vector<8x32xf32>, vector<32x128xf32>, vector<8x128xf32> -> vector<8x128xf32>
    %130 = arith.addf %128, %129 : vector<8x128xf32>
    %131 = arith.mulf %130, %12 : vector<8x128xf32>
    %132 = math.tanh %131 : vector<8x128xf32>
    %133 = arith.mulf %132, %12 : vector<8x128xf32>
    %134 = arith.addf %133, %15 : vector<8x128xf32>
    %135 = vector.extract_strided_slice %134 {offsets = [0, 0], sizes = [8, 32], strides = [1, 1]} : vector<8x128xf32> to vector<8x32xf32>
    %136 = vector.extract_strided_slice %134 {offsets = [0, 32], sizes = [8, 32], strides = [1, 1]} : vector<8x128xf32> to vector<8x32xf32>
    %137 = vector.extract_strided_slice %134 {offsets = [0, 64], sizes = [8, 32], strides = [1, 1]} : vector<8x128xf32> to vector<8x32xf32>
    %138 = vector.extract_strided_slice %134 {offsets = [0, 96], sizes = [8, 32], strides = [1, 1]} : vector<8x128xf32> to vector<8x32xf32>
    %139 = arith.mulf %136, %123 : vector<8x32xf32>
    %140 = arith.mulf %135, %137 : vector<8x32xf32>
    %141 = arith.addf %139, %140 : vector<8x32xf32>
    %142 = math.tanh %141 : vector<8x32xf32>
    %143 = arith.mulf %138, %142 : vector<8x32xf32>
    %c7_i32 = arith.constant 7 : i32
    %144 = arith.index_cast %c7_i32 : i32 to index
    %c0_31 = arith.constant 0 : index
    %c0_32 = arith.constant 0 : index
    %145 = vector.load %arg2[%144, %c0_31, %c0_32] : memref<8x8x128xf32, #tpu.memory_space<vmem>>, vector<1x8x128xf32>
    %146 = vector.shape_cast %145 : vector<1x8x128xf32> to vector<8x128xf32>
    %cst_33 = arith.constant dense<0.000000e+00> : vector<8x128xf32>
    %147 = tpu.matmul %143, %3, %cst_33 {dimension_numbers = #tpu.dot_dimension_numbers<[1], [0], [0], [1], [0, 0, 1, 1], [], []>} : vector<8x32xf32>, vector<32x128xf32>, vector<8x128xf32> -> vector<8x128xf32>
    %148 = arith.addf %146, %147 : vector<8x128xf32>
    %149 = arith.mulf %148, %12 : vector<8x128xf32>
    %150 = math.tanh %149 : vector<8x128xf32>
    %151 = arith.mulf %150, %12 : vector<8x128xf32>
    %152 = arith.addf %151, %15 : vector<8x128xf32>
    %153 = vector.extract_strided_slice %152 {offsets = [0, 0], sizes = [8, 32], strides = [1, 1]} : vector<8x128xf32> to vector<8x32xf32>
    %154 = vector.extract_strided_slice %152 {offsets = [0, 32], sizes = [8, 32], strides = [1, 1]} : vector<8x128xf32> to vector<8x32xf32>
    %155 = vector.extract_strided_slice %152 {offsets = [0, 64], sizes = [8, 32], strides = [1, 1]} : vector<8x128xf32> to vector<8x32xf32>
    %156 = vector.extract_strided_slice %152 {offsets = [0, 96], sizes = [8, 32], strides = [1, 1]} : vector<8x128xf32> to vector<8x32xf32>
    %157 = arith.mulf %154, %141 : vector<8x32xf32>
    %158 = arith.mulf %153, %155 : vector<8x32xf32>
    %159 = arith.addf %157, %158 : vector<8x32xf32>
    %160 = math.tanh %159 : vector<8x32xf32>
    %161 = arith.mulf %156, %160 : vector<8x32xf32>
    %c8_i32 = arith.constant 8 : i32
    %c0_34 = arith.constant 0 : index
    %c0_35 = arith.constant 0 : index
    %162 = vector.load %arg7[%c0_34, %c0_35] : memref<8x32xf32, #tpu.memory_space<vmem>>, vector<8x32xf32>
    tpu.vector_store %arg7[%c0_34, %c0_35], %161 {strides = array<i32>} : memref<8x32xf32, #tpu.memory_space<vmem>>, vector<8x32xf32>,
    %c0_36 = arith.constant 0 : index
    %c0_37 = arith.constant 0 : index
    %163 = vector.load %arg8[%c0_36, %c0_37] : memref<8x32xf32, #tpu.memory_space<vmem>>, vector<8x32xf32>
    tpu.vector_store %arg8[%c0_36, %c0_37], %159 {strides = array<i32>} : memref<8x32xf32, #tpu.memory_space<vmem>>, vector<8x32xf32>,
    %c0_i32_38 = arith.constant 0 : i32
    %164 = arith.cmpi eq, %arg1, %c0_i32_38 : i32
    %165 = arith.extui %164 : i1 to i32
    %c0_i32_39 = arith.constant 0 : i32
    %166 = arith.cmpi ne, %165, %c0_i32_39 : i32
    scf.if %166 {
      %c0_40 = arith.constant 0 : index
      %c0_41 = arith.constant 0 : index
      %167 = vector.load %arg4[%c0_40, %c0_41] : memref<32x3xf32, #tpu.memory_space<vmem>>, vector<32x3xf32>
      %cst_42 = arith.constant dense<0.000000e+00> : vector<8x3xf32>
      %168 = tpu.matmul %161, %167, %cst_42 {dimension_numbers = #tpu.dot_dimension_numbers<[1], [0], [0], [1], [0, 0, 1, 1], [], []>} : vector<8x32xf32>, vector<32x3xf32>, vector<8x3xf32> -> vector<8x3xf32>
      %c0_43 = arith.constant 0 : index
      %c0_44 = arith.constant 0 : index
      %169 = vector.load %arg5[%c0_43, %c0_44] : memref<1x3xf32, #tpu.memory_space<vmem>>, vector<1x3xf32>
      %170 = vector.broadcast %169 : vector<1x3xf32> to vector<8x3xf32>
      %171 = arith.addf %168, %170 : vector<8x3xf32>
      %172 = arith.negf %171 : vector<8x3xf32>
      %173 = math.exp %172 : vector<8x3xf32>
      %cst_45 = arith.constant 1.000000e+00 : f32
      %174 = vector.broadcast %cst_45 : f32 to vector<8x3xf32>
      %175 = arith.addf %174, %173 : vector<8x3xf32>
      %176 = arith.divf %174, %175 : vector<8x3xf32>
      %c0_46 = arith.constant 0 : index
      %c0_47 = arith.constant 0 : index
      %177 = vector.load %arg6[%c0_46, %c0_47] : memref<8x3xf32, #tpu.memory_space<vmem>>, vector<8x3xf32>
      tpu.vector_store %arg6[%c0_46, %c0_47], %176 {strides = array<i32>} : memref<8x3xf32, #tpu.memory_space<vmem>>, vector<8x3xf32>,
    } else {
    }
    return
  }
  func.func @transform_0(%arg0: i32, %arg1: i32) -> (i32, i32, i32) {
    %c0_i32 = arith.constant 0 : i32
    %c0_i32_0 = arith.constant 0 : i32
    return %arg1, %arg0, %c0_i32 : i32, i32, i32
  }
  func.func @transform_1(%arg0: i32, %arg1: i32) -> (i32, i32) {
    %c0_i32 = arith.constant 0 : i32
    %c0_i32_0 = arith.constant 0 : i32
    %c0_i32_1 = arith.constant 0 : i32
    return %c0_i32, %c0_i32_0 : i32, i32
  }
  func.func @transform_2(%arg0: i32, %arg1: i32) -> (i32, i32) {
    %c0_i32 = arith.constant 0 : i32
    %c0_i32_0 = arith.constant 0 : i32
    %c0_i32_1 = arith.constant 0 : i32
    return %c0_i32, %c0_i32_0 : i32, i32
  }
  func.func @transform_3(%arg0: i32, %arg1: i32) -> (i32, i32) {
    %c0_i32 = arith.constant 0 : i32
    %c0_i32_0 = arith.constant 0 : i32
    %c0_i32_1 = arith.constant 0 : i32
    return %c0_i32, %c0_i32_0 : i32, i32
  }
  func.func @transform_4(%arg0: i32, %arg1: i32) -> (i32, i32) {
    %c0_i32 = arith.constant 0 : i32
    %c0_i32_0 = arith.constant 0 : i32
    return %arg0, %c0_i32 : i32, i32
  }
}

</mosaic_0001>

<llo_original>
// kernel: tpu_custom_call.1
$region0: #{tpu_custom_call.1}
  #allocation0 [shape = 'u32[]', space=smem, size = 0x4, offset = 0x4, fixed_abs, tag = 'smem constant byte address 0x4 - core index']
  #allocation1 [shape = 'u32[144,128]{1,0:T(1,128)}', space=vmem, size = 0x12000, scoped, tag = 'internal scratch']
  #allocation2 [shape = 'f32[8,32]{1,0:T(8,128)}', space=vmem, size = 0x1000, scoped, tag = 'scratch operand']
  #allocation3 [shape = 'f32[8,32]{1,0:T(8,128)}', space=vmem, size = 0x1000, scoped, tag = 'scratch operand']
  %s0 = inlined_call_operand.hbm [shape: f32[8,8,128], index: 0, kind: input, shape index: {}]
  %s1 = inlined_call_operand.vmem [shape: f32[32,128], index: 1, kind: input, shape index: {}]
  %s2 = inlined_call_operand.vmem [shape: f32[32,3], index: 2, kind: input, shape index: {}]
  %s3 = inlined_call_operand.vmem [shape: f32[1,3], index: 3, kind: input, shape index: {}]
  %s4 = inlined_call_operand.vmem [shape: f32[8,3], index: 4, kind: output, shape index: {}]
  %s5 = sld [smem:[#allocation0]]
  $region38: #{tpu_custom_call.1} parent=0
    _
  %s7 = ssub.s32 1, %s5
  %s8 = scalar_select 0, %s7, %s5
  $region1: #{tpu_custom_call.1} parent=0
    #allocation4 [shape = 'u8[32768]{0}', space=vmem, size = 0x8000, scoped, tag = 'input window, operand 0, single buffered']
    #allocation5 [shape = 's32[1]{0}', space=sflag, size = 0x4, scoped, tag = 'scoped memory for tpu_custom_call.1']
    %9 = vsyncpa [#allocation5], 0
    // Predicated region
    $region2: #{tpu_custom_call.1} parent=1 // pred_check
      _
    $region3: #{tpu_custom_call.1} parent=1 // pred_check_branch
      %11 = sbr.rel (0) target = $region5
    $region4: #{tpu_custom_call.1} parent=1 // pred_region
      %s13 = ssub.s32 1024, 1024
      %14 = vsyncadd [#allocation5], %s13
      %s15 = sshll.u32 [#allocation4], 4
      %s16 = int_to_ptr.vmem [resolvable:$true] %s15
      %21 = dma.hbm_to_vmem [thread:$0]  %s0, 1024, %s16, [#allocation5], 128, 128, 8
    $region5: #{tpu_custom_call.1} parent=1 // pred_fallthru
      _
    // Predicated region
    $region6: #{tpu_custom_call.1} parent=1 // pred_check
      _
    $region7: #{tpu_custom_call.1} parent=1 // pred_check_branch
      %23 = sbr.rel (0) target = $region9
    $region8: #{tpu_custom_call.1} parent=1 // pred_region
      _
    $region9: #{tpu_custom_call.1} parent=1 // pred_fallthru
      _
    // Predicated region
    $region10: #{tpu_custom_call.1} parent=1 // pred_check
      _
    $region11: #{tpu_custom_call.1} parent=1 // pred_check_branch
      %25 = sbr.rel (0) target = $region13
    $region12: #{tpu_custom_call.1} parent=1 // pred_region
      _
    $region13: #{tpu_custom_call.1} parent=1 // pred_fallthru
      _
    // Predicated region
    $region14: #{tpu_custom_call.1} parent=1 // pred_check
      _
    $region15: #{tpu_custom_call.1} parent=1 // pred_check_branch
      %27 = sbr.rel (0) target = $region17
    $region16: #{tpu_custom_call.1} parent=1 // pred_region
      _
    $region17: #{tpu_custom_call.1} parent=1 // pred_fallthru
      _
    // Predicated region
    $region18: #{tpu_custom_call.1} parent=1 // pred_check
      _
    $region19: #{tpu_custom_call.1} parent=1 // pred_check_branch
      %29 = sbr.rel (0) target = $region21
    $region20: #{tpu_custom_call.1} parent=1 // pred_region
      %30 = dma.done [#allocation5], 1024
    $region21: #{tpu_custom_call.1} parent=1 // pred_fallthru
      _
    %p31 = scmp.eq.s32.totalorder 0, 0
    // Predicated region
    $region22: #{tpu_custom_call.1} parent=1 // pred_check
      %p32 = pneg %p31
    $region23: #{tpu_custom_call.1} parent=1 // pred_check_branch
      %34 = sbr.rel (%p32) target = $region25
    $region24: #{tpu_custom_call.1} parent=1 // pred_region
      %vm35 = vcmask 261120
      %36 = vst.msk [vmem:[#allocation2] sm:$0xff] %vm35, 0.0
      %37 = vst.msk [vmem:[#allocation3] sm:$0xff] %vm35, 0.0
    $region25: #{tpu_custom_call.1} parent=1 // pred_fallthru
      _
    %v38 = vld [vmem:[%s1] sm:$0xff]
    %v39 = vld [vmem:[%s1 + $0x8] sm:$0xff]
    %v40 = vld [vmem:[%s1 + $0x10] sm:$0xff]
    %v41 = vld [vmem:[%s1 + $0x18] sm:$0xff]
    %v42 = vlaneseq
    %v43 = vand.u32 %v42, 127
    %vm44 = vcmp.ge.s32.totalorder %v43, 64
    %vm45 = vcmp.lt.s32.totalorder %v43, 96
    %vm46 = vmand %vm44, %vm45
    %v47 = vsel %vm46, 1.0, 0.5
    %v48 = vsel %vm46, 0.0, 0.5
    %v49 = vld [vmem:[#allocation2] sm:$0xff]
    %v50 = vld [vmem:[#allocation3] sm:$0xff]
    %v51 = vld [vmem:[#allocation4] sm:$0xff]
    %vm52 = vcmask 261120
    %v54 = vsel %vm52, %v49, 0
    %56 = vmatprep.subr.mxu0 0.0
    %57 = vmatpush1.msra.mxu0 %v38
    %58 = vmatprep.subr.mxu0 0.0
    %59 = vmatpush1.msra.mxu0 %v39
    %60 = vmatprep.subr.mxu0 0.0
    %61 = vmatpush1.msra.mxu0 %v40
    %62 = vmatprep.subr.mxu0 0.0
    %63 = vmatpush1.msra.mxu0 %v41
    %64 = vmatprep.subr.mxu0 0.0
    %65 = vmatpush1.msra.mxu0 0.0
    %66 = vmatprep.subr.mxu0 0.0
    %67 = vmatpush1.msra.mxu0 0.0
    %68 = vmatprep.subr.mxu0 0.0
    %69 = vmatpush1.msra.mxu0 0.0
    %70 = vmatprep.subr.mxu0 0.0
    %71 = vmatpush1.msra.mxu0 0.0
    %72 = vmatprep.subr.mxu0 0.0
    %73 = vmatpush1.msra.mxu0 0.0
    %74 = vmatprep.subr.mxu0 0.0
    %75 = vmatpush1.msra.mxu0 0.0
    %76 = vmatprep.subr.mxu0 0.0
    %77 = vmatpush1.msra.mxu0 0.0
    %78 = vmatprep.subr.mxu0 0.0
    %79 = vmatpush1.msra.mxu0 0.0
    %80 = vmatprep.subr.mxu0 0.0
    %81 = vmatpush1.msra.mxu0 0.0
    %82 = vmatprep.subr.mxu0 0.0
    %83 = vmatpush1.msra.mxu0 0.0
    %84 = vmatprep.subr.mxu0 0.0
    %85 = vmatpush1.msra.mxu0 0.0
    %86 = vmatprep.subr.mxu0 0.0
    %87 = vmatpush1.msra.mxu0 0.0
    %88 = vmatprep.subr.mxu0 0.0
    %89 = vmatpush1.msra.mxu0 0.0
    %90 = vmatprep.subr.mxu0 0.0
    %91 = vmatpush1.msra.mxu0 0.0
    %92 = vmatprep.subr.mxu0 0.0
    %93 = vmatpush1.msra.mxu0 0.0
    %94 = vmatprep.subr.mxu0 0.0
    %95 = vmatpush1.msra.mxu0 0.0
    %96 = vmatprep.subr.mxu0 0.0
    %97 = vmatpush1.msra.mxu0 0.0
    %98 = vmatprep.subr.mxu0 0.0
    %99 = vmatpush1.msra.mxu0 0.0
    %100 = vmatprep.subr.mxu0 0.0
    %101 = vmatpush1.msra.mxu0 0.0
    %102 = vmatprep.subr.mxu0 0.0
    %103 = vmatpush1.msra.mxu0 0.0
    %104 = vmatprep.subr.mxu0 0.0
    %105 = vmatpush1.msra.mxu0 0.0
    %106 = vmatprep.subr.mxu0 0.0
    %107 = vmatpush1.msra.mxu0 0.0
    %108 = vmatprep.subr.mxu0 0.0
    %109 = vmatpush1.msra.mxu0 0.0
    %110 = vmatprep.subr.mxu0 0.0
    %111 = vmatpush1.msra.mxu0 0.0
    %112 = vmatprep.subr.mxu0 0.0
    %113 = vmatpush1.msra.mxu0 0.0
    %114 = vmatprep.subr.mxu0 0.0
    %115 = vmatpush1.msra.mxu0 0.0
    %116 = vmatprep.subr.mxu0 0.0
    %117 = vmatpush1.msra.mxu0 0.0
    %118 = vmatprep.subr.mxu0 0.0
    %119 = vmatpush1.msra.mxu0 0.0
    %120 = vmatprep.mubr.f32.mxu0 0.0
    %121 = vmatmul.mubr.f32.gmra.mrb[0].mxu0 %v54
    %v122 = vpop.f32.mrb[0].mxu0
    %v123 = vadd.f32 0.0, %v122
    %v124 = vpop.f32.mrb[0].mxu0
    %125 = vdwg.mxu0
    %v126 = vadd.f32 %v51, %v123
    %v127 = vmul.f32 %v126, %v47
    %v128 = vtanh.pop %v127
    %v129 = vmul.f32 %v128, %v47
    %v130 = vadd.f32 %v129, %v48
    %132 = vrot.lane.b32.xlu0 %v50, 32
    %v133 = vpop.permute.xlu0 %132
    %v135 = vmul.f32 %v130, %v133
    %137 = vrot.lane.b32.xlu0 %v130, 64
    %v138 = vpop.permute.xlu0 %137
    %v140 = vmul.f32 %v130, %v138
    %142 = vrot.lane.b32.xlu0 %v140, 32
    %v143 = vpop.permute.xlu0 %142
    %v145 = vadd.f32 %v135, %v143
    %v146 = vtanh.pop %v145
    %148 = vrot.lane.b32.xlu0 %v146, 64
    %v149 = vpop.permute.xlu0 %148
    %v151 = vmul.f32 %v130, %v149
    %s152 = scalar_lea.vmem [#allocation4], 8
    %v153 = vld [vmem:[%s152] sm:$0xff]
    %155 = vrot.lane.b32.xlu0 %v151, 32
    %v156 = vpop.permute.xlu0 %155
    %v157 = vsel %vm52, %v156, 0
    %159 = vmatprep.subr.mxu0 0.0
    %160 = vmatpush1.msra.mxu0 %v38
    %161 = vmatprep.subr.mxu0 0.0
    %162 = vmatpush1.msra.mxu0 %v39
    %163 = vmatprep.subr.mxu0 0.0
    %164 = vmatpush1.msra.mxu0 %v40
    %165 = vmatprep.subr.mxu0 0.0
    %166 = vmatpush1.msra.mxu0 %v41
    %167 = vmatprep.subr.mxu0 0.0
    %168 = vmatpush1.msra.mxu0 0.0
    %169 = vmatprep.subr.mxu0 0.0
    %170 = vmatpush1.msra.mxu0 0.0
    %171 = vmatprep.subr.mxu0 0.0
    %172 = vmatpush1.msra.mxu0 0.0
    %173 = vmatprep.subr.mxu0 0.0
    %174 = vmatpush1.msra.mxu0 0.0
    %175 = vmatprep.subr.mxu0 0.0
    %176 = vmatpush1.msra.mxu0 0.0
    %177 = vmatprep.subr.mxu0 0.0
    %178 = vmatpush1.msra.mxu0 0.0
    %179 = vmatprep.subr.mxu0 0.0
    %180 = vmatpush1.msra.mxu0 0.0
    %181 = vmatprep.subr.mxu0 0.0
    %182 = vmatpush1.msra.mxu0 0.0
    %183 = vmatprep.subr.mxu0 0.0
    %184 = vmatpush1.msra.mxu0 0.0
    %185 = vmatprep.subr.mxu0 0.0
    %186 = vmatpush1.msra.mxu0 0.0
    %187 = vmatprep.subr.mxu0 0.0
    %188 = vmatpush1.msra.mxu0 0.0
    %189 = vmatprep.subr.mxu0 0.0
    %190 = vmatpush1.msra.mxu0 0.0
    %191 = vmatprep.subr.mxu0 0.0
    %192 = vmatpush1.msra.mxu0 0.0
    %193 = vmatprep.subr.mxu0 0.0
    %194 = vmatpush1.msra.mxu0 0.0
    %195 = vmatprep.subr.mxu0 0.0
    %196 = vmatpush1.msra.mxu0 0.0
    %197 = vmatprep.subr.mxu0 0.0
    %198 = vmatpush1.msra.mxu0 0.0
    %199 = vmatprep.subr.mxu0 0.0
    %200 = vmatpush1.msra.mxu0 0.0
    %201 = vmatprep.subr.mxu0 0.0
    %202 = vmatpush1.msra.mxu0 0.0
    %203 = vmatprep.subr.mxu0 0.0
    %204 = vmatpush1.msra.mxu0 0.0
    %205 = vmatprep.subr.mxu0 0.0
    %206 = vmatpush1.msra.mxu0 0.0
    %207 = vmatprep.subr.mxu0 0.0
    %208 = vmatpush1.msra.mxu0 0.0
    %209 = vmatprep.subr.mxu0 0.0
    %210 = vmatpush1.msra.mxu0 0.0
    %211 = vmatprep.subr.mxu0 0.0
    %212 = vmatpush1.msra.mxu0 0.0
    %213 = vmatprep.subr.mxu0 0.0
    %214 = vmatpush1.msra.mxu0 0.0
    %215 = vmatprep.subr.mxu0 0.0
    %216 = vmatpush1.msra.mxu0 0.0
    %217 = vmatprep.subr.mxu0 0.0
    %218 = vmatpush1.msra.mxu0 0.0
    %219 = vmatprep.subr.mxu0 0.0
    %220 = vmatpush1.msra.mxu0 0.0
    %221 = vmatprep.subr.mxu0 0.0
    %222 = vmatpush1.msra.mxu0 0.0
    %223 = vmatprep.mubr.f32.mxu0 0.0
    %224 = vmatmul.mubr.f32.gmra.mrb[0].mxu0 %v157
    %v225 = vpop.f32.mrb[0].mxu0
    %v226 = vadd.f32 0.0, %v225
    %v227 = vpop.f32.mrb[0].mxu0
    %228 = vdwg.mxu0
    %v229 = vadd.f32 %v153, %v226
    %v230 = vmul.f32 %v229, %v47
    %v231 = vtanh.pop %v230
    %v232 = vmul.f32 %v231, %v47
    %v233 = vadd.f32 %v232, %v48
    %v234 = vmul.f32 %v233, %v145
    %236 = vrot.lane.b32.xlu0 %v233, 64
    %v237 = vpop.permute.xlu0 %236
    %v239 = vmul.f32 %v233, %v237
    %241 = vrot.lane.b32.xlu0 %v239, 32
    %v242 = vpop.permute.xlu0 %241
    %v244 = vadd.f32 %v234, %v242
    %v245 = vtanh.pop %v244
    %247 = vrot.lane.b32.xlu0 %v245, 64
    %v248 = vpop.permute.xlu0 %247
    %v250 = vmul.f32 %v233, %v248
    %s251 = scalar_lea.vmem [#allocation4], 16
    %v252 = vld [vmem:[%s251] sm:$0xff]
    %254 = vrot.lane.b32.xlu0 %v250, 32
    %v255 = vpop.permute.xlu0 %254
    %v256 = vsel %vm52, %v255, 0
    %258 = vmatprep.subr.mxu0 0.0
    %259 = vmatpush1.msra.mxu0 %v38
    %260 = vmatprep.subr.mxu0 0.0
    %261 = vmatpush1.msra.mxu0 %v39
    %262 = vmatprep.subr.mxu0 0.0
    %263 = vmatpush1.msra.mxu0 %v40
    %264 = vmatprep.subr.mxu0 0.0
    %265 = vmatpush1.msra.mxu0 %v41
    %266 = vmatprep.subr.mxu0 0.0
    %267 = vmatpush1.msra.mxu0 0.0
    %268 = vmatprep.subr.mxu0 0.0
    %269 = vmatpush1.msra.mxu0 0.0
    %270 = vmatprep.subr.mxu0 0.0
    %271 = vmatpush1.msra.mxu0 0.0
    %272 = vmatprep.subr.mxu0 0.0
    %273 = vmatpush1.msra.mxu0 0.0
    %274 = vmatprep.subr.mxu0 0.0
    %275 = vmatpush1.msra.mxu0 0.0
    %276 = vmatprep.subr.mxu0 0.0
    %277 = vmatpush1.msra.mxu0 0.0
    %278 = vmatprep.subr.mxu0 0.0
    %279 = vmatpush1.msra.mxu0 0.0
    %280 = vmatprep.subr.mxu0 0.0
    %281 = vmatpush1.msra.mxu0 0.0
    %282 = vmatprep.subr.mxu0 0.0
    %283 = vmatpush1.msra.mxu0 0.0
    %284 = vmatprep.subr.mxu0 0.0
    %285 = vmatpush1.msra.mxu0 0.0
    %286 = vmatprep.subr.mxu0 0.0
    %287 = vmatpush1.msra.mxu0 0.0
    %288 = vmatprep.subr.mxu0 0.0
    %289 = vmatpush1.msra.mxu0 0.0
    %290 = vmatprep.subr.mxu0 0.0
    %291 = vmatpush1.msra.mxu0 0.0
    %292 = vmatprep.subr.mxu0 0.0
    %293 = vmatpush1.msra.mxu0 0.0
    %294 = vmatprep.subr.mxu0 0.0
    %295 = vmatpush1.msra.mxu0 0.0
    %296 = vmatprep.subr.mxu0 0.0
    %297 = vmatpush1.msra.mxu0 0.0
    %298 = vmatprep.subr.mxu0 0.0
    %299 = vmatpush1.msra.mxu0 0.0
    %300 = vmatprep.subr.mxu0 0.0
    %301 = vmatpush1.msra.mxu0 0.0
    %302 = vmatprep.subr.mxu0 0.0
    %303 = vmatpush1.msra.mxu0 0.0
    %304 = vmatprep.subr.mxu0 0.0
    %305 = vmatpush1.msra.mxu0 0.0
    %306 = vmatprep.subr.mxu0 0.0
    %307 = vmatpush1.msra.mxu0 0.0
    %308 = vmatprep.subr.mxu0 0.0
    %309 = vmatpush1.msra.mxu0 0.0
    %310 = vmatprep.subr.mxu0 0.0
    %311 = vmatpush1.msra.mxu0 0.0
    %312 = vmatprep.subr.mxu0 0.0
    %313 = vmatpush1.msra.mxu0 0.0
    %314 = vmatprep.subr.mxu0 0.0
    %315 = vmatpush1.msra.mxu0 0.0
    %316 = vmatprep.subr.mxu0 0.0
    %317 = vmatpush1.msra.mxu0 0.0
    %318 = vmatprep.subr.mxu0 0.0
    %319 = vmatpush1.msra.mxu0 0.0
    %320 = vmatprep.subr.mxu0 0.0
    %321 = vmatpush1.msra.mxu0 0.0
    %322 = vmatprep.mubr.f32.mxu0 0.0
    %323 = vmatmul.mubr.f32.gmra.mrb[0].mxu0 %v256
    %v324 = vpop.f32.mrb[0].mxu0
    %v325 = vadd.f32 0.0, %v324
    %v326 = vpop.f32.mrb[0].mxu0
    %327 = vdwg.mxu0
    %v328 = vadd.f32 %v252, %v325
    %v329 = vmul.f32 %v328, %v47
    %v330 = vtanh.pop %v329
    %v331 = vmul.f32 %v330, %v47
    %v332 = vadd.f32 %v331, %v48
    %v333 = vmul.f32 %v332, %v244
    %335 = vrot.lane.b32.xlu0 %v332, 64
    %v336 = vpop.permute.xlu0 %335
    %v338 = vmul.f32 %v332, %v336
    %340 = vrot.lane.b32.xlu0 %v338, 32
    %v341 = vpop.permute.xlu0 %340
    %v343 = vadd.f32 %v333, %v341
    %v344 = vtanh.pop %v343
    %346 = vrot.lane.b32.xlu0 %v344, 64
    %v347 = vpop.permute.xlu0 %346
    %v349 = vmul.f32 %v332, %v347
    %s350 = scalar_lea.vmem [#allocation4], 24
    %v351 = vld [vmem:[%s350] sm:$0xff]
    %353 = vrot.lane.b32.xlu0 %v349, 32
    %v354 = vpop.permute.xlu0 %353
    %v355 = vsel %vm52, %v354, 0
    %357 = vmatprep.subr.mxu0 0.0
    %358 = vmatpush1.msra.mxu0 %v38
    %359 = vmatprep.subr.mxu0 0.0
    %360 = vmatpush1.msra.mxu0 %v39
    %361 = vmatprep.subr.mxu0 0.0
    %362 = vmatpush1.msra.mxu0 %v40
    %363 = vmatprep.subr.mxu0 0.0
    %364 = vmatpush1.msra.mxu0 %v41
    %365 = vmatprep.subr.mxu0 0.0
    %366 = vmatpush1.msra.mxu0 0.0
    %367 = vmatprep.subr.mxu0 0.0
    %368 = vmatpush1.msra.mxu0 0.0
    %369 = vmatprep.subr.mxu0 0.0
    %370 = vmatpush1.msra.mxu0 0.0
    %371 = vmatprep.subr.mxu0 0.0
    %372 = vmatpush1.msra.mxu0 0.0
    %373 = vmatprep.subr.mxu0 0.0
    %374 = vmatpush1.msra.mxu0 0.0
    %375 = vmatprep.subr.mxu0 0.0
    %376 = vmatpush1.msra.mxu0 0.0
    %377 = vmatprep.subr.mxu0 0.0
    %378 = vmatpush1.msra.mxu0 0.0
    %379 = vmatprep.subr.mxu0 0.0
    %380 = vmatpush1.msra.mxu0 0.0
    %381 = vmatprep.subr.mxu0 0.0
    %382 = vmatpush1.msra.mxu0 0.0
    %383 = vmatprep.subr.mxu0 0.0
    %384 = vmatpush1.msra.mxu0 0.0
    %385 = vmatprep.subr.mxu0 0.0
    %386 = vmatpush1.msra.mxu0 0.0
    %387 = vmatprep.subr.mxu0 0.0
    %388 = vmatpush1.msra.mxu0 0.0
    %389 = vmatprep.subr.mxu0 0.0
    %390 = vmatpush1.msra.mxu0 0.0
    %391 = vmatprep.subr.mxu0 0.0
    %392 = vmatpush1.msra.mxu0 0.0
    %393 = vmatprep.subr.mxu0 0.0
    %394 = vmatpush1.msra.mxu0 0.0
    %395 = vmatprep.subr.mxu0 0.0
    %396 = vmatpush1.msra.mxu0 0.0
    %397 = vmatprep.subr.mxu0 0.0
    %398 = vmatpush1.msra.mxu0 0.0
    %399 = vmatprep.subr.mxu0 0.0
    %400 = vmatpush1.msra.mxu0 0.0
    %401 = vmatprep.subr.mxu0 0.0
    %402 = vmatpush1.msra.mxu0 0.0
    %403 = vmatprep.subr.mxu0 0.0
    %404 = vmatpush1.msra.mxu0 0.0
    %405 = vmatprep.subr.mxu0 0.0
    %406 = vmatpush1.msra.mxu0 0.0
    %407 = vmatprep.subr.mxu0 0.0
    %408 = vmatpush1.msra.mxu0 0.0
    %409 = vmatprep.subr.mxu0 0.0
    %410 = vmatpush1.msra.mxu0 0.0
    %411 = vmatprep.subr.mxu0 0.0
    %412 = vmatpush1.msra.mxu0 0.0
    %413 = vmatprep.subr.mxu0 0.0
    %414 = vmatpush1.msra.mxu0 0.0
    %415 = vmatprep.subr.mxu0 0.0
    %416 = vmatpush1.msra.mxu0 0.0
    %417 = vmatprep.subr.mxu0 0.0
    %418 = vmatpush1.msra.mxu0 0.0
    %419 = vmatprep.subr.mxu0 0.0
    %420 = vmatpush1.msra.mxu0 0.0
    %421 = vmatprep.mubr.f32.mxu0 0.0
    %422 = vmatmul.mubr.f32.gmra.mrb[0].mxu0 %v355
    %v423 = vpop.f32.mrb[0].mxu0
    %v424 = vadd.f32 0.0, %v423
    %v425 = vpop.f32.mrb[0].mxu0
    %426 = vdwg.mxu0
    %v427 = vadd.f32 %v351, %v424
    %v428 = vmul.f32 %v427, %v47
    %v429 = vtanh.pop %v428
    %v430 = vmul.f32 %v429, %v47
    %v431 = vadd.f32 %v430, %v48
    %v432 = vmul.f32 %v431, %v343
    %434 = vrot.lane.b32.xlu0 %v431, 64
    %v435 = vpop.permute.xlu0 %434
    %v437 = vmul.f32 %v431, %v435
    %439 = vrot.lane.b32.xlu0 %v437, 32
    %v440 = vpop.permute.xlu0 %439
    %v442 = vadd.f32 %v432, %v440
    %v443 = vtanh.pop %v442
    %445 = vrot.lane.b32.xlu0 %v443, 64
    %v446 = vpop.permute.xlu0 %445
    %v448 = vmul.f32 %v431, %v446
    %s449 = scalar_lea.vmem [#allocation4], 32
    %v450 = vld [vmem:[%s449] sm:$0xff]
    %452 = vrot.lane.b32.xlu0 %v448, 32
    %v453 = vpop.permute.xlu0 %452
    %v454 = vsel %vm52, %v453, 0
    %456 = vmatprep.subr.mxu0 0.0
    %457 = vmatpush1.msra.mxu0 %v38
    %458 = vmatprep.subr.mxu0 0.0
    %459 = vmatpush1.msra.mxu0 %v39
    %460 = vmatprep.subr.mxu0 0.0
    %461 = vmatpush1.msra.mxu0 %v40
    %462 = vmatprep.subr.mxu0 0.0
    %463 = vmatpush1.msra.mxu0 %v41
    %464 = vmatprep.subr.mxu0 0.0
    %465 = vmatpush1.msra.mxu0 0.0
    %466 = vmatprep.subr.mxu0 0.0
    %467 = vmatpush1.msra.mxu0 0.0
    %468 = vmatprep.subr.mxu0 0.0
    %469 = vmatpush1.msra.mxu0 0.0
    %470 = vmatprep.subr.mxu0 0.0
    %471 = vmatpush1.msra.mxu0 0.0
    %472 = vmatprep.subr.mxu0 0.0
    %473 = vmatpush1.msra.mxu0 0.0
    %474 = vmatprep.subr.mxu0 0.0
    %475 = vmatpush1.msra.mxu0 0.0
    %476 = vmatprep.subr.mxu0 0.0
    %477 = vmatpush1.msra.mxu0 0.0
    %478 = vmatprep.subr.mxu0 0.0
    %479 = vmatpush1.msra.mxu0 0.0
    %480 = vmatprep.subr.mxu0 0.0
    %481 = vmatpush1.msra.mxu0 0.0
    %482 = vmatprep.subr.mxu0 0.0
    %483 = vmatpush1.msra.mxu0 0.0
    %484 = vmatprep.subr.mxu0 0.0
    %485 = vmatpush1.msra.mxu0 0.0
    %486 = vmatprep.subr.mxu0 0.0
    %487 = vmatpush1.msra.mxu0 0.0
    %488 = vmatprep.subr.mxu0 0.0
    %489 = vmatpush1.msra.mxu0 0.0
    %490 = vmatprep.subr.mxu0 0.0
    %491 = vmatpush1.msra.mxu0 0.0
    %492 = vmatprep.subr.mxu0 0.0
    %493 = vmatpush1.msra.mxu0 0.0
    %494 = vmatprep.subr.mxu0 0.0
    %495 = vmatpush1.msra.mxu0 0.0
    %496 = vmatprep.subr.mxu0 0.0
    %497 = vmatpush1.msra.mxu0 0.0
    %498 = vmatprep.subr.mxu0 0.0
    %499 = vmatpush1.msra.mxu0 0.0
    %500 = vmatprep.subr.mxu0 0.0
    %501 = vmatpush1.msra.mxu0 0.0
    %502 = vmatprep.subr.mxu0 0.0
    %503 = vmatpush1.msra.mxu0 0.0
    %504 = vmatprep.subr.mxu0 0.0
    %505 = vmatpush1.msra.mxu0 0.0
    %506 = vmatprep.subr.mxu0 0.0
    %507 = vmatpush1.msra.mxu0 0.0
    %508 = vmatprep.subr.mxu0 0.0
    %509 = vmatpush1.msra.mxu0 0.0
    %510 = vmatprep.subr.mxu0 0.0
    %511 = vmatpush1.msra.mxu0 0.0
    %512 = vmatprep.subr.mxu0 0.0
    %513 = vmatpush1.msra.mxu0 0.0
    %514 = vmatprep.subr.mxu0 0.0
    %515 = vmatpush1.msra.mxu0 0.0
    %516 = vmatprep.subr.mxu0 0.0
    %517 = vmatpush1.msra.mxu0 0.0
    %518 = vmatprep.subr.mxu0 0.0
    %519 = vmatpush1.msra.mxu0 0.0
    %520 = vmatprep.mubr.f32.mxu0 0.0
    %521 = vmatmul.mubr.f32.gmra.mrb[0].mxu0 %v454
    %v522 = vpop.f32.mrb[0].mxu0
    %v523 = vadd.f32 0.0, %v522
    %v524 = vpop.f32.mrb[0].mxu0
    %525 = vdwg.mxu0
    %v526 = vadd.f32 %v450, %v523
    %v527 = vmul.f32 %v526, %v47
    %v528 = vtanh.pop %v527
    %v529 = vmul.f32 %v528, %v47
    %v530 = vadd.f32 %v529, %v48
    %v531 = vmul.f32 %v530, %v442
    %533 = vrot.lane.b32.xlu0 %v530, 64
    %v534 = vpop.permute.xlu0 %533
    %v536 = vmul.f32 %v530, %v534
    %538 = vrot.lane.b32.xlu0 %v536, 32
    %v539 = vpop.permute.xlu0 %538
    %v541 = vadd.f32 %v531, %v539
    %v542 = vtanh.pop %v541
    %544 = vrot.lane.b32.xlu0 %v542, 64
    %v545 = vpop.permute.xlu0 %544
    %v547 = vmul.f32 %v530, %v545
    %s548 = scalar_lea.vmem [#allocation4], 40
    %v549 = vld [vmem:[%s548] sm:$0xff]
    %551 = vrot.lane.b32.xlu0 %v547, 32
    %v552 = vpop.permute.xlu0 %551
    %v553 = vsel %vm52, %v552, 0
    %555 = vmatprep.subr.mxu0 0.0
    %556 = vmatpush1.msra.mxu0 %v38
    %557 = vmatprep.subr.mxu0 0.0
    %558 = vmatpush1.msra.mxu0 %v39
    %559 = vmatprep.subr.mxu0 0.0
    %560 = vmatpush1.msra.mxu0 %v40
    %561 = vmatprep.subr.mxu0 0.0
    %562 = vmatpush1.msra.mxu0 %v41
    %563 = vmatprep.subr.mxu0 0.0
    %564 = vmatpush1.msra.mxu0 0.0
    %565 = vmatprep.subr.mxu0 0.0
    %566 = vmatpush1.msra.mxu0 0.0
    %567 = vmatprep.subr.mxu0 0.0
    %568 = vmatpush1.msra.mxu0 0.0
    %569 = vmatprep.subr.mxu0 0.0
    %570 = vmatpush1.msra.mxu0 0.0
    %571 = vmatprep.subr.mxu0 0.0
    %572 = vmatpush1.msra.mxu0 0.0
    %573 = vmatprep.subr.mxu0 0.0
    %574 = vmatpush1.msra.mxu0 0.0
    %575 = vmatprep.subr.mxu0 0.0
    %576 = vmatpush1.msra.mxu0 0.0
    %577 = vmatprep.subr.mxu0 0.0
    %578 = vmatpush1.msra.mxu0 0.0
    %579 = vmatprep.subr.mxu0 0.0
    %580 = vmatpush1.msra.mxu0 0.0
    %581 = vmatprep.subr.mxu0 0.0
    %582 = vmatpush1.msra.mxu0 0.0
    %583 = vmatprep.subr.mxu0 0.0
    %584 = vmatpush1.msra.mxu0 0.0
    %585 = vmatprep.subr.mxu0 0.0
    %586 = vmatpush1.msra.mxu0 0.0
    %587 = vmatprep.subr.mxu0 0.0
    %588 = vmatpush1.msra.mxu0 0.0
    %589 = vmatprep.subr.mxu0 0.0
    %590 = vmatpush1.msra.mxu0 0.0
    %591 = vmatprep.subr.mxu0 0.0
    %592 = vmatpush1.msra.mxu0 0.0
    %593 = vmatprep.subr.mxu0 0.0
    %594 = vmatpush1.msra.mxu0 0.0
    %595 = vmatprep.subr.mxu0 0.0
    %596 = vmatpush1.msra.mxu0 0.0
    %597 = vmatprep.subr.mxu0 0.0
    %598 = vmatpush1.msra.mxu0 0.0
    %599 = vmatprep.subr.mxu0 0.0
    %600 = vmatpush1.msra.mxu0 0.0
    %601 = vmatprep.subr.mxu0 0.0
    %602 = vmatpush1.msra.mxu0 0.0
    %603 = vmatprep.subr.mxu0 0.0
    %604 = vmatpush1.msra.mxu0 0.0
    %605 = vmatprep.subr.mxu0 0.0
    %606 = vmatpush1.msra.mxu0 0.0
    %607 = vmatprep.subr.mxu0 0.0
    %608 = vmatpush1.msra.mxu0 0.0
    %609 = vmatprep.subr.mxu0 0.0
    %610 = vmatpush1.msra.mxu0 0.0
    %611 = vmatprep.subr.mxu0 0.0
    %612 = vmatpush1.msra.mxu0 0.0
    %613 = vmatprep.subr.mxu0 0.0
    %614 = vmatpush1.msra.mxu0 0.0
    %615 = vmatprep.subr.mxu0 0.0
    %616 = vmatpush1.msra.mxu0 0.0
    %617 = vmatprep.subr.mxu0 0.0
    %618 = vmatpush1.msra.mxu0 0.0
    %619 = vmatprep.mubr.f32.mxu0 0.0
    %620 = vmatmul.mubr.f32.gmra.mrb[0].mxu0 %v553
    %v621 = vpop.f32.mrb[0].mxu0
    %v622 = vadd.f32 0.0, %v621
    %v623 = vpop.f32.mrb[0].mxu0
    %624 = vdwg.mxu0
    %v625 = vadd.f32 %v549, %v622
    %v626 = vmul.f32 %v625, %v47
    %v627 = vtanh.pop %v626
    %v628 = vmul.f32 %v627, %v47
    %v629 = vadd.f32 %v628, %v48
    %v630 = vmul.f32 %v629, %v541
    %632 = vrot.lane.b32.xlu0 %v629, 64
    %v633 = vpop.permute.xlu0 %632
    %v635 = vmul.f32 %v629, %v633
    %637 = vrot.lane.b32.xlu0 %v635, 32
    %v638 = vpop.permute.xlu0 %637
    %v640 = vadd.f32 %v630, %v638
    %v641 = vtanh.pop %v640
    %643 = vrot.lane.b32.xlu0 %v641, 64
    %v644 = vpop.permute.xlu0 %643
    %v646 = vmul.f32 %v629, %v644
    %s647 = scalar_lea.vmem [#allocation4], 48
    %v648 = vld [vmem:[%s647] sm:$0xff]
    %650 = vrot.lane.b32.xlu0 %v646, 32
    %v651 = vpop.permute.xlu0 %650
    %v652 = vsel %vm52, %v651, 0
    %654 = vmatprep.subr.mxu0 0.0
    %655 = vmatpush1.msra.mxu0 %v38
    %656 = vmatprep.subr.mxu0 0.0
    %657 = vmatpush1.msra.mxu0 %v39
    %658 = vmatprep.subr.mxu0 0.0
    %659 = vmatpush1.msra.mxu0 %v40
    %660 = vmatprep.subr.mxu0 0.0
    %661 = vmatpush1.msra.mxu0 %v41
    %662 = vmatprep.subr.mxu0 0.0
    %663 = vmatpush1.msra.mxu0 0.0
    %664 = vmatprep.subr.mxu0 0.0
    %665 = vmatpush1.msra.mxu0 0.0
    %666 = vmatprep.subr.mxu0 0.0
    %667 = vmatpush1.msra.mxu0 0.0
    %668 = vmatprep.subr.mxu0 0.0
    %669 = vmatpush1.msra.mxu0 0.0
    %670 = vmatprep.subr.mxu0 0.0
    %671 = vmatpush1.msra.mxu0 0.0
    %672 = vmatprep.subr.mxu0 0.0
    %673 = vmatpush1.msra.mxu0 0.0
    %674 = vmatprep.subr.mxu0 0.0
    %675 = vmatpush1.msra.mxu0 0.0
    %676 = vmatprep.subr.mxu0 0.0
    %677 = vmatpush1.msra.mxu0 0.0
    %678 = vmatprep.subr.mxu0 0.0
    %679 = vmatpush1.msra.mxu0 0.0
    %680 = vmatprep.subr.mxu0 0.0
    %681 = vmatpush1.msra.mxu0 0.0
    %682 = vmatprep.subr.mxu0 0.0
    %683 = vmatpush1.msra.mxu0 0.0
    %684 = vmatprep.subr.mxu0 0.0
    %685 = vmatpush1.msra.mxu0 0.0
    %686 = vmatprep.subr.mxu0 0.0
    %687 = vmatpush1.msra.mxu0 0.0
    %688 = vmatprep.subr.mxu0 0.0
    %689 = vmatpush1.msra.mxu0 0.0
    %690 = vmatprep.subr.mxu0 0.0
    %691 = vmatpush1.msra.mxu0 0.0
    %692 = vmatprep.subr.mxu0 0.0
    %693 = vmatpush1.msra.mxu0 0.0
    %694 = vmatprep.subr.mxu0 0.0
    %695 = vmatpush1.msra.mxu0 0.0
    %696 = vmatprep.subr.mxu0 0.0
    %697 = vmatpush1.msra.mxu0 0.0
    %698 = vmatprep.subr.mxu0 0.0
    %699 = vmatpush1.msra.mxu0 0.0
    %700 = vmatprep.subr.mxu0 0.0
    %701 = vmatpush1.msra.mxu0 0.0
    %702 = vmatprep.subr.mxu0 0.0
    %703 = vmatpush1.msra.mxu0 0.0
    %704 = vmatprep.subr.mxu0 0.0
    %705 = vmatpush1.msra.mxu0 0.0
    %706 = vmatprep.subr.mxu0 0.0
    %707 = vmatpush1.msra.mxu0 0.0
    %708 = vmatprep.subr.mxu0 0.0
    %709 = vmatpush1.msra.mxu0 0.0
    %710 = vmatprep.subr.mxu0 0.0
    %711 = vmatpush1.msra.mxu0 0.0
    %712 = vmatprep.subr.mxu0 0.0
    %713 = vmatpush1.msra.mxu0 0.0
    %714 = vmatprep.subr.mxu0 0.0
    %715 = vmatpush1.msra.mxu0 0.0
    %716 = vmatprep.subr.mxu0 0.0
    %717 = vmatpush1.msra.mxu0 0.0
    %718 = vmatprep.mubr.f32.mxu0 0.0
    %719 = vmatmul.mubr.f32.gmra.mrb[0].mxu0 %v652
    %v720 = vpop.f32.mrb[0].mxu0
    %v721 = vadd.f32 0.0, %v720
    %v722 = vpop.f32.mrb[0].mxu0
    %723 = vdwg.mxu0
    %v724 = vadd.f32 %v648, %v721
    %v725 = vmul.f32 %v724, %v47
    %v726 = vtanh.pop %v725
    %v727 = vmul.f32 %v726, %v47
    %v728 = vadd.f32 %v727, %v48
    %v729 = vmul.f32 %v728, %v640
    %731 = vrot.lane.b32.xlu0 %v728, 64
    %v732 = vpop.permute.xlu0 %731
    %v734 = vmul.f32 %v728, %v732
    %736 = vrot.lane.b32.xlu0 %v734, 32
    %v737 = vpop.permute.xlu0 %736
    %v739 = vadd.f32 %v729, %v737
    %v740 = vtanh.pop %v739
    %742 = vrot.lane.b32.xlu0 %v740, 64
    %v743 = vpop.permute.xlu0 %742
    %v745 = vmul.f32 %v728, %v743
    %s746 = scalar_lea.vmem [#allocation4], 56
    %v747 = vld [vmem:[%s746] sm:$0xff]
    %749 = vrot.lane.b32.xlu0 %v745, 32
    %v750 = vpop.permute.xlu0 %749
    %v751 = vsel %vm52, %v750, 0
    %753 = vmatprep.subr.mxu0 0.0
    %754 = vmatpush1.msra.mxu0 %v38
    %755 = vmatprep.subr.mxu0 0.0
    %756 = vmatpush1.msra.mxu0 %v39
    %757 = vmatprep.subr.mxu0 0.0
    %758 = vmatpush1.msra.mxu0 %v40
    %759 = vmatprep.subr.mxu0 0.0
    %760 = vmatpush1.msra.mxu0 %v41
    %761 = vmatprep.subr.mxu0 0.0
    %762 = vmatpush1.msra.mxu0 0.0
    %763 = vmatprep.subr.mxu0 0.0
    %764 = vmatpush1.msra.mxu0 0.0
    %765 = vmatprep.subr.mxu0 0.0
    %766 = vmatpush1.msra.mxu0 0.0
    %767 = vmatprep.subr.mxu0 0.0
    %768 = vmatpush1.msra.mxu0 0.0
    %769 = vmatprep.subr.mxu0 0.0
    %770 = vmatpush1.msra.mxu0 0.0
    %771 = vmatprep.subr.mxu0 0.0
    %772 = vmatpush1.msra.mxu0 0.0
    %773 = vmatprep.subr.mxu0 0.0
    %774 = vmatpush1.msra.mxu0 0.0
    %775 = vmatprep.subr.mxu0 0.0
    %776 = vmatpush1.msra.mxu0 0.0
    %777 = vmatprep.subr.mxu0 0.0
    %778 = vmatpush1.msra.mxu0 0.0
    %779 = vmatprep.subr.mxu0 0.0
    %780 = vmatpush1.msra.mxu0 0.0
    %781 = vmatprep.subr.mxu0 0.0
    %782 = vmatpush1.msra.mxu0 0.0
    %783 = vmatprep.subr.mxu0 0.0
    %784 = vmatpush1.msra.mxu0 0.0
    %785 = vmatprep.subr.mxu0 0.0
    %786 = vmatpush1.msra.mxu0 0.0
    %787 = vmatprep.subr.mxu0 0.0
    %788 = vmatpush1.msra.mxu0 0.0
    %789 = vmatprep.subr.mxu0 0.0
    %790 = vmatpush1.msra.mxu0 0.0
    %791 = vmatprep.subr.mxu0 0.0
    %792 = vmatpush1.msra.mxu0 0.0
    %793 = vmatprep.subr.mxu0 0.0
    %794 = vmatpush1.msra.mxu0 0.0
    %795 = vmatprep.subr.mxu0 0.0
    %796 = vmatpush1.msra.mxu0 0.0
    %797 = vmatprep.subr.mxu0 0.0
    %798 = vmatpush1.msra.mxu0 0.0
    %799 = vmatprep.subr.mxu0 0.0
    %800 = vmatpush1.msra.mxu0 0.0
    %801 = vmatprep.subr.mxu0 0.0
    %802 = vmatpush1.msra.mxu0 0.0
    %803 = vmatprep.subr.mxu0 0.0
    %804 = vmatpush1.msra.mxu0 0.0
    %805 = vmatprep.subr.mxu0 0.0
    %806 = vmatpush1.msra.mxu0 0.0
    %807 = vmatprep.subr.mxu0 0.0
    %808 = vmatpush1.msra.mxu0 0.0
    %809 = vmatprep.subr.mxu0 0.0
    %810 = vmatpush1.msra.mxu0 0.0
    %811 = vmatprep.subr.mxu0 0.0
    %812 = vmatpush1.msra.mxu0 0.0
    %813 = vmatprep.subr.mxu0 0.0
    %814 = vmatpush1.msra.mxu0 0.0
    %815 = vmatprep.subr.mxu0 0.0
    %816 = vmatpush1.msra.mxu0 0.0
    %817 = vmatprep.mubr.f32.mxu0 0.0
    %818 = vmatmul.mubr.f32.gmra.mrb[0].mxu0 %v751
    %v819 = vpop.f32.mrb[0].mxu0
    %v820 = vadd.f32 0.0, %v819
    %v821 = vpop.f32.mrb[0].mxu0
    %822 = vdwg.mxu0
    %v823 = vadd.f32 %v747, %v820
    %v824 = vmul.f32 %v823, %v47
    %v825 = vtanh.pop %v824
    %v826 = vmul.f32 %v825, %v47
    %v827 = vadd.f32 %v826, %v48
    %v828 = vmul.f32 %v827, %v739
    %830 = vrot.lane.b32.xlu0 %v827, 64
    %v831 = vpop.permute.xlu0 %830
    %v833 = vmul.f32 %v827, %v831
    %835 = vrot.lane.b32.xlu0 %v833, 32
    %v836 = vpop.permute.xlu0 %835
    %v838 = vadd.f32 %v828, %v836
    %v839 = vtanh.pop %v838
    %841 = vrot.lane.b32.xlu0 %v839, 64
    %v842 = vpop.permute.xlu0 %841
    %v844 = vmul.f32 %v827, %v842
    %846 = vrot.lane.b32.xlu0 %v844, 32
    %v847 = vpop.permute.xlu0 %846
    %849 = vst.msk [vmem:[#allocation2] sm:$0xff] %vm52, %v847
    %851 = vrot.lane.b32.xlu0 %v838, 96
    %v852 = vpop.permute.xlu0 %851
    %854 = vst.msk [vmem:[#allocation3] sm:$0xff] %vm52, %v852
    // Predicated region
    $region26: #{tpu_custom_call.1} parent=1 // pred_check
      %p855 = pneg %p31
    $region27: #{tpu_custom_call.1} parent=1 // pred_check_branch
      %857 = sbr.rel (%p855) target = $region29
    $region28: #{tpu_custom_call.1} parent=1 // pred_region
      %v858 = vld [vmem:[%s2] sm:$0xff]
      %v859 = vld [vmem:[%s2 + $0x8] sm:$0xff]
      %v860 = vld [vmem:[%s2 + $0x10] sm:$0xff]
      %v861 = vld [vmem:[%s2 + $0x18] sm:$0xff]
      %v862 = vld [vmem:[%s3] sm:$0x1]
      %v864 = vlaneseq
      %v865 = vshrl.u32 %v864, 7
      %v866 = vsub.s32 0, %v865
      %v867 = vrot.slane %v862, %v866
      %v869 = vsel %vm52, %v847, 0
      %871 = vmatprep.subr.mxu0 0.0
      %872 = vmatpush1.msra.mxu0 %v858
      %873 = vmatprep.subr.mxu0 0.0
      %874 = vmatpush1.msra.mxu0 %v859
      %875 = vmatprep.subr.mxu0 0.0
      %876 = vmatpush1.msra.mxu0 %v860
      %877 = vmatprep.subr.mxu0 0.0
      %878 = vmatpush1.msra.mxu0 %v861
      %879 = vmatprep.subr.mxu0 0.0
      %880 = vmatpush1.msra.mxu0 0.0
      %881 = vmatprep.subr.mxu0 0.0
      %882 = vmatpush1.msra.mxu0 0.0
      %883 = vmatprep.subr.mxu0 0.0
      %884 = vmatpush1.msra.mxu0 0.0
      %885 = vmatprep.subr.mxu0 0.0
      %886 = vmatpush1.msra.mxu0 0.0
      %887 = vmatprep.subr.mxu0 0.0
      %888 = vmatpush1.msra.mxu0 0.0
      %889 = vmatprep.subr.mxu0 0.0
      %890 = vmatpush1.msra.mxu0 0.0
      %891 = vmatprep.subr.mxu0 0.0
      %892 = vmatpush1.msra.mxu0 0.0
      %893 = vmatprep.subr.mxu0 0.0
      %894 = vmatpush1.msra.mxu0 0.0
      %895 = vmatprep.subr.mxu0 0.0
      %896 = vmatpush1.msra.mxu0 0.0
      %897 = vmatprep.subr.mxu0 0.0
      %898 = vmatpush1.msra.mxu0 0.0
      %899 = vmatprep.subr.mxu0 0.0
      %900 = vmatpush1.msra.mxu0 0.0
      %901 = vmatprep.subr.mxu0 0.0
      %902 = vmatpush1.msra.mxu0 0.0
      %903 = vmatprep.subr.mxu0 0.0
      %904 = vmatpush1.msra.mxu0 0.0
      %905 = vmatprep.subr.mxu0 0.0
      %906 = vmatpush1.msra.mxu0 0.0
      %907 = vmatprep.subr.mxu0 0.0
      %908 = vmatpush1.msra.mxu0 0.0
      %909 = vmatprep.subr.mxu0 0.0
      %910 = vmatpush1.msra.mxu0 0.0
      %911 = vmatprep.subr.mxu0 0.0
      %912 = vmatpush1.msra.mxu0 0.0
      %913 = vmatprep.subr.mxu0 0.0
      %914 = vmatpush1.msra.mxu0 0.0
      %915 = vmatprep.subr.mxu0 0.0
      %916 = vmatpush1.msra.mxu0 0.0
      %917 = vmatprep.subr.mxu0 0.0
      %918 = vmatpush1.msra.mxu0 0.0
      %919 = vmatprep.subr.mxu0 0.0
      %920 = vmatpush1.msra.mxu0 0.0
      %921 = vmatprep.subr.mxu0 0.0
      %922 = vmatpush1.msra.mxu0 0.0
      %923 = vmatprep.subr.mxu0 0.0
      %924 = vmatpush1.msra.mxu0 0.0
      %925 = vmatprep.subr.mxu0 0.0
      %926 = vmatpush1.msra.mxu0 0.0
      %927 = vmatprep.subr.mxu0 0.0
      %928 = vmatpush1.msra.mxu0 0.0
      %929 = vmatprep.subr.mxu0 0.0
      %930 = vmatpush1.msra.mxu0 0.0
      %931 = vmatprep.subr.mxu0 0.0
      %932 = vmatpush1.msra.mxu0 0.0
      %933 = vmatprep.subr.mxu0 0.0
      %934 = vmatpush1.msra.mxu0 0.0
      %935 = vmatprep.mubr.f32.mxu0 0.0
      %936 = vmatmul.mubr.f32.gmra.mrb[0].mxu0 %v869
      %v937 = vpop.f32.mrb[0].mxu0
      %v938 = vadd.f32 %v867, %v937
      %v939 = vpop.f32.mrb[0].mxu0
      %940 = vdwg.mxu0
      %v941 = vxor.u32 %v938, 2147483648
      %v942 = vmul.f32 %v941, 1.442695
      %v943 = vpow.pop %v942
      %v944 = vadd.f32 %v943, 1.0
      %v945 = vrcp.pop %v944
      %v946 = vmul.f32 1.0, %v945
      %vm947 = vcmask 23552
      %948 = vst.msk [vmem:[%s4] sm:$0xff] %vm947, %v946
    $region29: #{tpu_custom_call.1} parent=1 // pred_fallthru
      _
    // Predicated region
    $region30: #{tpu_custom_call.1} parent=1 // pred_check
      _
    $region31: #{tpu_custom_call.1} parent=1 // pred_check_branch
      %950 = sbr.rel (0) target = $region33
    $region32: #{tpu_custom_call.1} parent=1 // pred_region
      _
    $region33: #{tpu_custom_call.1} parent=1 // pred_fallthru
      _
    // Predicated region
    $region34: #{tpu_custom_call.1} parent=1 // pred_check
      _
    $region35: #{tpu_custom_call.1} parent=1 // pred_check_branch
      %952 = sbr.rel (0) target = $region37
    $region36: #{tpu_custom_call.1} parent=1 // pred_region
      _
    $region37: #{tpu_custom_call.1} parent=1 // pred_fallthru
      _
    %953 = vsyncpa [#allocation5], 1

</llo_original>
